<compile_context>
chip_gen: v7x
topology: tpu7x:2x2x1
jax: 0.10.0
libtpu: 0.0.40
codegen_flags: <defaults>
</compile_context>

<pallas_src>
import numpy as np
import jax
import jax.numpy as jnp
from jax.experimental import pallas as pl
from jax.experimental.pallas import tpu as pltpu

_SUPPORT = 4.0                     # cubic kernel support size
_EPS = float(np.finfo(np.float32).eps)
_MAX_BT = 32                       # bound on planes packed per grid step


# ---------------------------------------------------------------------------
# ResizeRight weight construction (parameter/glue code, plain numpy)
# ---------------------------------------------------------------------------
def _cubic(x):
    absx = np.abs(x)
    absx2 = absx ** 2
    absx3 = absx ** 3
    return ((1.5 * absx3 - 2.5 * absx2 + 1.0) * (absx <= 1.0) +
            (-0.5 * absx3 + 2.5 * absx2 - 4.0 * absx + 2.0) *
            ((absx > 1.0) & (absx <= 2.0)))


def _resize_matrix(in_sz, out_sz, antialias=True):
    """Dense (out_sz, in_sz) 1-D resize matrix with ResizeRight semantics."""
    scale = out_sz / in_sz
    if antialias and scale < 1.0:
        kernel = lambda a: scale * _cubic(scale * a)
        support = _SUPPORT / scale
    else:
        kernel = _cubic
        support = _SUPPORT

    out_coords = np.arange(out_sz, dtype=np.float64)
    projected = (out_coords / scale + (in_sz - 1) / 2.0
                 - (out_sz - 1) / (2.0 * scale))
    left = np.ceil(projected - support / 2.0 - _EPS).astype(np.int64)
    ntaps = int(np.ceil(support - _EPS)) + 1
    fov = left[:, None] + np.arange(ntaps)[None, :]               # (out, ntaps)

    weights = kernel(projected[:, None] - fov)                     # (out, ntaps)
    sums = weights.sum(axis=1, keepdims=True)
    sums[sums == 0] = 1.0
    weights = weights / sums

    # pad_mode='constant' (zeros): out-of-range neighbors contribute nothing,
    # but they DO participate in the normalization above (ResizeRight order).
    valid = (fov >= 0) & (fov < in_sz)
    weights = np.where(valid, weights, 0.0)
    fov = np.clip(fov, 0, in_sz - 1)

    mat = np.zeros((out_sz, in_sz), dtype=np.float64)
    rows = np.repeat(np.arange(out_sz), ntaps)
    np.add.at(mat, (rows, fov.reshape(-1)), weights.reshape(-1))
    return mat.astype(np.float32)


def _prep_weight(mat_np, cdt):
    """Cast a (out, in) resize matrix to the compute dtype.

    For bf16 the rows are rescaled after quantization so each output pixel's
    total weight matches the f64 construction (fixes the bf16 row-sum drift
    flagged in review)."""
    w = jnp.asarray(mat_np, dtype=jnp.float32)
    if cdt == jnp.bfloat16:
        target = jnp.sum(w, axis=1, keepdims=True)
        wq = w.astype(jnp.bfloat16)
        got = jnp.sum(wq.astype(jnp.float32), axis=1, keepdims=True)
        scale = jnp.where(got == 0, 1.0, target / got)
        return (wq.astype(jnp.float32) * scale).astype(jnp.bfloat16)
    return w


# ---------------------------------------------------------------------------
# Pallas kernel: bt planes per grid step, two flat MXU passes + lane pivot
# ---------------------------------------------------------------------------
def _make_resize_kernel(bt, h_in, w_in, h_out, w_out):
    if bt == 1:
        def kernel(ah_ref, awt_ref, x_ref, o_ref, t_ref):
            # W pass: (h_in, w_in) @ (w_in, w_out), f32 accumulation on the MXU.
            t_ref[...] = jnp.dot(x_ref[0], awt_ref[...],
                                 preferred_element_type=jnp.float32
                                 ).astype(t_ref.dtype)
            # H pass: (h_out, h_in) @ (h_in, w_out).
            y = jnp.dot(ah_ref[...], t_ref[...],
                        preferred_element_type=jnp.float32)
            o_ref[0] = y.astype(o_ref.dtype)
        return kernel

    def kernel(ah_ref, awt_ref, x_ref, o_ref, t_ref, m_ref):
        # W pass: ONE flat matmul over all bt planes:
        #   (bt*h_in, w_in) @ (w_in, w_out) -> (bt*h_in, w_out)
        t_ref[...] = jnp.dot(x_ref[0], awt_ref[...],
                             preferred_element_type=jnp.float32
                             ).astype(t_ref.dtype)
        # Pivot (bt, h_in, w_out) -> (h_in, bt*w_out): lane-pack the batch so
        # the H pass is a single wide MXU matmul and the output store is
        # lane-dense.  These are plain VMEM slab copies (ld/st slots only).
        for i in range(bt):
            m_ref[:, i * w_out:(i + 1) * w_out] = \
                t_ref[i * h_in:(i + 1) * h_in, :]
        # H pass: ONE wide matmul (h_out, h_in) @ (h_in, bt*w_out).
        y = jnp.dot(ah_ref[...], m_ref[...],
                    preferred_element_type=jnp.float32)
        o_ref[0] = y.astype(o_ref.dtype)

    return kernel


def _pick_bt(b, w_out, budget_cap):
    """Pick planes-per-step: prefer lane-dense output (bt*w_out >= 128), then
    minimal batch padding, then the largest bt (amortizes per-step overhead)."""
    cap = max(1, min(_MAX_BT, b, budget_cap))
    best_key, best_bt = None, 1
    for bt in range(1, cap + 1):
        steps = -(-b // bt)
        pad = steps * bt - b
        lane_ok = (bt * w_out >= 128) or (bt == cap)
        key = (0 if lane_ok else 1, pad, -bt)
        if best_key is None or key < best_key:
            best_key, best_bt = key, bt
    return best_bt


def resize_right(x, size, interp_method='cubic', antialias=True,
                 compute_dtype=None):
    """ResizeRight.forward: resize the last two dims of an NCHW input."""
    if interp_method != 'cubic':
        # TODO(synk): only the default cubic interp_method is implemented.
        raise NotImplementedError("only interp_method='cubic' is supported")
    if isinstance(size, int):
        size = (size, size)
    if not (jnp.issubdtype(x.dtype, jnp.floating) or x.dtype == jnp.bfloat16):
        # TODO(synk): integer inputs would need explicit rounding/clamping.
        raise NotImplementedError("only floating-point inputs are supported")

    n, c, h_in, w_in = x.shape
    h_out, w_out = int(size[0]), int(size[1])
    b = n * c

    # Compute dtype: bf16 inputs stay bf16 on the MXU (f32 accumulation);
    # everything else computes in f32 unless bf16 is requested explicitly
    # (useful on v5e where f32 matmuls are slow).
    if compute_dtype is None:
        cdt = jnp.bfloat16 if x.dtype == jnp.bfloat16 else jnp.float32
    else:
        cdt = (jnp.bfloat16
               if np.dtype(compute_dtype) == np.dtype(jnp.bfloat16)
               else jnp.float32)
    csz = np.dtype(cdt).itemsize
    osz = np.dtype(x.dtype).itemsize

    a_h = _prep_weight(_resize_matrix(h_in, h_out, antialias), cdt)   # (h_out,h_in)
    a_wt = _prep_weight(_resize_matrix(w_in, w_out, antialias), cdt).T  # (w_in,w_out)

    # ---- VMEM budget -> bt (planes per grid step) --------------------------
    try:
        info = pltpu.get_tpu_info()
        vmem_cap = int(getattr(info, "vmem_capacity_bytes", 64 * 1024 * 1024))
    except Exception:  # pragma: no cover - conservative (v7x-sized) fallback
        vmem_cap = 64 * 1024 * 1024
    vmem_limit = max(min(int(vmem_cap * 0.7), 100 << 20), 16 << 20)
    weight_bytes = (h_out * h_in + w_in * w_out) * csz
    per_plane = (2 * h_in * w_in * csz            # input block (double-buffered)
                 + 2 * h_out * w_out * osz        # output block (double-buffered)
                 + 2 * h_in * w_out * csz         # t + m pivot scratch
                 + 4 * (h_in * w_out + h_out * w_out))  # f32 matmul temporaries
    # TODO(synk): pipeline_mode=pl.Buffered(1) on the resident weight specs
    #             would halve the weight VMEM; left at default buffering.
    budget = vmem_limit - 2 * weight_bytes - (8 << 20)
    budget_cap = max(1, int(budget // max(per_plane, 1)))
    bt = _pick_bt(b, w_out, budget_cap)
    n_steps = -(-b // bt)
    b_pad = n_steps * bt

    # ---- data prep (pure-metadata reshapes; pad only for ragged batches) ---
    xb = x.reshape(b * h_in, w_in).astype(cdt)
    if b_pad > b:
        xb = jnp.pad(xb, ((0, (b_pad - b) * h_in), (0, 0)))
    x3 = xb.reshape(n_steps, bt * h_in, w_in)

    kernel = _make_resize_kernel(bt, h_in, w_in, h_out, w_out)
    scratch = [pltpu.VMEM((bt * h_in, w_out), cdt)]
    if bt > 1:
        scratch.append(pltpu.VMEM((h_in, bt * w_out), cdt))

    flops = 2 * b_pad * (h_in * w_in * w_out + h_out * h_in * w_out)
    cost = pl.CostEstimate(
        flops=int(flops), transcendentals=0,
        bytes_accessed=int(b_pad * h_in * w_in * csz
                           + b_pad * h_out * w_out * osz + weight_bytes))

    out3 = pl.pallas_call(
        kernel,
        out_shape=jax.ShapeDtypeStruct((n_steps, h_out, bt * w_out), x.dtype),
        grid_spec=pltpu.PrefetchScalarGridSpec(
            num_scalar_prefetch=0,
            grid=(n_steps,),
            in_specs=[
                pl.BlockSpec((h_out, h_in), lambda i: (0, 0)),        # A_h
                pl.BlockSpec((w_in, w_out), lambda i: (0, 0)),        # A_w^T
                pl.BlockSpec((1, bt * h_in, w_in), lambda i: (i, 0, 0)),
            ],
            out_specs=pl.BlockSpec((1, h_out, bt * w_out),
                                   lambda i: (i, 0, 0)),
            scratch_shapes=scratch,
        ),
        compiler_params=pltpu.CompilerParams(
            dimension_semantics=("parallel",),
            vmem_limit_bytes=int(vmem_limit)),
        cost_estimate=cost,
    )(a_h, a_wt, x3)

    # Undo the lane packing outside the kernel (no-op when bt == 1).
    out = jnp.transpose(out3.reshape(n_steps, h_out, bt, w_out), (0, 2, 1, 3))
    out = out.reshape(b_pad, h_out, w_out)[:b]
    return out.reshape(n, c, h_out, w_out)


class ResizeRight:
    """Mirror of the PyTorch ResizeRight module."""

    def __init__(self, size, interp_method='cubic', antialias=True,
                 compute_dtype=None):
        self.size = size
        self.interp_method = interp_method
        self.antialias = antialias
        self.compute_dtype = compute_dtype

    def __call__(self, x):
        return resize_right(x, self.size, self.interp_method, self.antialias,
                            self.compute_dtype)


if __name__ == "__main__":
    key = jax.random.PRNGKey(0)
    x = jax.random.normal(key, (2, 4, 16, 16), dtype=jnp.float32)

    def reference(xf, size, antialias=True):
        a_h = jnp.asarray(_resize_matrix(xf.shape[2], size[0], antialias))
        a_w = jnp.asarray(_resize_matrix(xf.shape[3], size[1], antialias))
        return jnp.einsum('oh,nchw,pw->ncop', a_h, xf, a_w)

    # 1) downscale (antialiased path)
    y = jax.block_until_ready(ResizeRight((8, 12))(x))
    assert y.shape == (2, 4, 8, 12), y.shape
    assert jnp.allclose(y, reference(x, (8, 12)), atol=1e-4, rtol=1e-4)

    # 2) downscale with the opposite aspect-ratio change
    y2 = jax.block_until_ready(ResizeRight((12, 8))(x))
    assert y2.shape == (2, 4, 12, 8), y2.shape
    assert jnp.allclose(y2, reference(x, (12, 8)), atol=1e-4, rtol=1e-4)

    # 3) upscale (plain cubic, antialiasing not triggered)
    y3 = jax.block_until_ready(ResizeRight((24, 20))(x))
    assert y3.shape == (2, 4, 24, 20), y3.shape
    assert jnp.allclose(y3, reference(x, (24, 20)), atol=1e-4, rtol=1e-4)

    # 4) ragged/prime batch: exercises batch padding + multi-step grid
    x5 = jax.random.normal(jax.random.PRNGKey(1), (37, 1, 16, 16),
                           dtype=jnp.float32)
    y5 = jax.block_until_ready(ResizeRight((8, 12))(x5))
    assert y5.shape == (37, 1, 8, 12), y5.shape
    assert jnp.allclose(y5, reference(x5, (8, 12)), atol=1e-4, rtol=1e-4)

    # 5) bf16 input stays bf16 on the MXU (f32 accumulation, loose tolerance)
    xb16 = x.astype(jnp.bfloat16)
    y4 = jax.block_until_ready(ResizeRight((8, 12))(xb16))
    ref4 = reference(xb16.astype(jnp.float32), (8, 12))
    assert jnp.allclose(y4.astype(jnp.float32), ref4, atol=1e-1, rtol=5e-2)

    print("KERNEL_OK")
</pallas_src>

<mosaic_0001>
module attributes {stable_mosaic.version = 11 : i64} {
  func.func @kernel(%arg0: i32, %arg1: memref<8x16xf32, #tpu.memory_space<vmem>>, %arg2: memref<16x12xf32, #tpu.memory_space<vmem>>, %arg3: memref<1x128x16xf32, #tpu.memory_space<vmem>>, %arg4: memref<1x8x96xf32, #tpu.memory_space<vmem>>, %arg5: memref<128x12xf32, #tpu.memory_space<vmem>>, %arg6: memref<16x96xf32, #tpu.memory_space<vmem>>) attributes {dimension_semantics = [#tpu.dimension_semantics<parallel>], iteration_bounds = array<i64: 1>, scalar_prefetch = 0 : i64, scratch_operands = 2 : i64, tpu.core_type = #tpu.core_type<tc>, window_params = [{pipeline_mode = #tpu.pipeline_mode<synchronous>, transform_indices = @transform_0, window_bounds = array<i64: 8, 16>}, {pipeline_mode = #tpu.pipeline_mode<synchronous>, transform_indices = @transform_1, window_bounds = array<i64: 16, 12>}, {transform_indices = @transform_2, window_bounds = array<i64: 1, 128, 16>}, {transform_indices = @transform_3, window_bounds = array<i64: 1, 8, 96>}]} {
    %c0 = arith.constant 0 : index
    %c0_0 = arith.constant 0 : index
    %c0_1 = arith.constant 0 : index
    %0 = vector.load %arg3[%c0, %c0_0, %c0_1] : memref<1x128x16xf32, #tpu.memory_space<vmem>>, vector<1x128x16xf32>
    %1 = vector.shape_cast %0 : vector<1x128x16xf32> to vector<128x16xf32>
    %c0_2 = arith.constant 0 : index
    %c0_3 = arith.constant 0 : index
    %2 = vector.load %arg2[%c0_2, %c0_3] : memref<16x12xf32, #tpu.memory_space<vmem>>, vector<16x12xf32>
    %cst = arith.constant dense<0.000000e+00> : vector<128x12xf32>
    %3 = tpu.matmul %1, %2, %cst {dimension_numbers = #tpu.dot_dimension_numbers<[1], [0], [0], [1], [0, 0, 1, 1], [], []>} : vector<128x16xf32>, vector<16x12xf32>, vector<128x12xf32> -> vector<128x12xf32>
    %c0_4 = arith.constant 0 : index
    %c0_5 = arith.constant 0 : index
    %4 = vector.load %arg5[%c0_4, %c0_5] : memref<128x12xf32, #tpu.memory_space<vmem>>, vector<128x12xf32>
    tpu.vector_store %arg5[%c0_4, %c0_5], %3 {strides = array<i32>} : memref<128x12xf32, #tpu.memory_space<vmem>>, vector<128x12xf32>,
    %c0_6 = arith.constant 0 : index
    %c0_7 = arith.constant 0 : index
    %5 = vector.load %arg5[%c0_6, %c0_7] : memref<128x12xf32, #tpu.memory_space<vmem>>, vector<16x12xf32>
    %c0_8 = arith.constant 0 : index
    %c0_9 = arith.constant 0 : index
    %6 = vector.load %arg6[%c0_8, %c0_9] : memref<16x96xf32, #tpu.memory_space<vmem>>, vector<16x12xf32>
    tpu.vector_store %arg6[%c0_8, %c0_9], %5 {strides = array<i32>} : memref<16x96xf32, #tpu.memory_space<vmem>>, vector<16x12xf32>,
    %c16 = arith.constant 16 : index
    %c0_10 = arith.constant 0 : index
    %7 = vector.load %arg5[%c16, %c0_10] : memref<128x12xf32, #tpu.memory_space<vmem>>, vector<16x12xf32>
    %c0_11 = arith.constant 0 : index
    %c12 = arith.constant 12 : index
    %8 = vector.load %arg6[%c0_11, %c12] : memref<16x96xf32, #tpu.memory_space<vmem>>, vector<16x12xf32>
    tpu.vector_store %arg6[%c0_11, %c12], %7 {strides = array<i32>} : memref<16x96xf32, #tpu.memory_space<vmem>>, vector<16x12xf32>,
    %c32 = arith.constant 32 : index
    %c0_12 = arith.constant 0 : index
    %9 = vector.load %arg5[%c32, %c0_12] : memref<128x12xf32, #tpu.memory_space<vmem>>, vector<16x12xf32>
    %c0_13 = arith.constant 0 : index
    %c24 = arith.constant 24 : index
    %10 = vector.load %arg6[%c0_13, %c24] : memref<16x96xf32, #tpu.memory_space<vmem>>, vector<16x12xf32>
    tpu.vector_store %arg6[%c0_13, %c24], %9 {strides = array<i32>} : memref<16x96xf32, #tpu.memory_space<vmem>>, vector<16x12xf32>,
    %c48 = arith.constant 48 : index
    %c0_14 = arith.constant 0 : index
    %11 = vector.load %arg5[%c48, %c0_14] : memref<128x12xf32, #tpu.memory_space<vmem>>, vector<16x12xf32>
    %c0_15 = arith.constant 0 : index
    %c36 = arith.constant 36 : index
    %12 = vector.load %arg6[%c0_15, %c36] : memref<16x96xf32, #tpu.memory_space<vmem>>, vector<16x12xf32>
    tpu.vector_store %arg6[%c0_15, %c36], %11 {strides = array<i32>} : memref<16x96xf32, #tpu.memory_space<vmem>>, vector<16x12xf32>,
    %c64 = arith.constant 64 : index
    %c0_16 = arith.constant 0 : index
    %13 = vector.load %arg5[%c64, %c0_16] : memref<128x12xf32, #tpu.memory_space<vmem>>, vector<16x12xf32>
    %c0_17 = arith.constant 0 : index
    %c48_18 = arith.constant 48 : index
    %14 = vector.load %arg6[%c0_17, %c48_18] : memref<16x96xf32, #tpu.memory_space<vmem>>, vector<16x12xf32>
    tpu.vector_store %arg6[%c0_17, %c48_18], %13 {strides = array<i32>} : memref<16x96xf32, #tpu.memory_space<vmem>>, vector<16x12xf32>,
    %c80 = arith.constant 80 : index
    %c0_19 = arith.constant 0 : index
    %15 = vector.load %arg5[%c80, %c0_19] : memref<128x12xf32, #tpu.memory_space<vmem>>, vector<16x12xf32>
    %c0_20 = arith.constant 0 : index
    %c60 = arith.constant 60 : index
    %16 = vector.load %arg6[%c0_20, %c60] : memref<16x96xf32, #tpu.memory_space<vmem>>, vector<16x12xf32>
    tpu.vector_store %arg6[%c0_20, %c60], %15 {strides = array<i32>} : memref<16x96xf32, #tpu.memory_space<vmem>>, vector<16x12xf32>,
    %c96 = arith.constant 96 : index
    %c0_21 = arith.constant 0 : index
    %17 = vector.load %arg5[%c96, %c0_21] : memref<128x12xf32, #tpu.memory_space<vmem>>, vector<16x12xf32>
    %c0_22 = arith.constant 0 : index
    %c72 = arith.constant 72 : index
    %18 = vector.load %arg6[%c0_22, %c72] : memref<16x96xf32, #tpu.memory_space<vmem>>, vector<16x12xf32>
    tpu.vector_store %arg6[%c0_22, %c72], %17 {strides = array<i32>} : memref<16x96xf32, #tpu.memory_space<vmem>>, vector<16x12xf32>,
    %c112 = arith.constant 112 : index
    %c0_23 = arith.constant 0 : index
    %19 = vector.load %arg5[%c112, %c0_23] : memref<128x12xf32, #tpu.memory_space<vmem>>, vector<16x12xf32>
    %c0_24 = arith.constant 0 : index
    %c84 = arith.constant 84 : index
    %20 = vector.load %arg6[%c0_24, %c84] : memref<16x96xf32, #tpu.memory_space<vmem>>, vector<16x12xf32>
    tpu.vector_store %arg6[%c0_24, %c84], %19 {strides = array<i32>} : memref<16x96xf32, #tpu.memory_space<vmem>>, vector<16x12xf32>,
    %c0_25 = arith.constant 0 : index
    %c0_26 = arith.constant 0 : index
    %21 = vector.load %arg1[%c0_25, %c0_26] : memref<8x16xf32, #tpu.memory_space<vmem>>, vector<8x16xf32>
    %c0_27 = arith.constant 0 : index
    %c0_28 = arith.constant 0 : index
    %22 = vector.load %arg6[%c0_27, %c0_28] : memref<16x96xf32, #tpu.memory_space<vmem>>, vector<16x96xf32>
    %cst_29 = arith.constant dense<0.000000e+00> : vector<8x96xf32>
    %23 = tpu.matmul %21, %22, %cst_29 {dimension_numbers = #tpu.dot_dimension_numbers<[1], [0], [0], [1], [0, 0, 1, 1], [], []>} : vector<8x16xf32>, vector<16x96xf32>, vector<8x96xf32> -> vector<8x96xf32>
    %c0_30 = arith.constant 0 : index
    %c0_31 = arith.constant 0 : index
    %c0_32 = arith.constant 0 : index
    %24 = vector.load %arg4[%c0_30, %c0_31, %c0_32] : memref<1x8x96xf32, #tpu.memory_space<vmem>>, vector<1x8x96xf32>
    %25 = vector.shape_cast %24 : vector<1x8x96xf32> to vector<8x96xf32>
    %26 = vector.shape_cast %23 : vector<8x96xf32> to vector<1x8x96xf32>
    tpu.vector_store %arg4[%c0_30, %c0_31, %c0_32], %26 {strides = array<i32>} : memref<1x8x96xf32, #tpu.memory_space<vmem>>, vector<1x8x96xf32>,
    return
  }
  func.func @transform_0(%arg0: i32) -> (i32, i32) {
    %c0_i32 = arith.constant 0 : i32
    %c0_i32_0 = arith.constant 0 : i32
    %c0_i32_1 = arith.constant 0 : i32
    return %c0_i32, %c0_i32_0 : i32, i32
  }
  func.func @transform_1(%arg0: i32) -> (i32, i32) {
    %c0_i32 = arith.constant 0 : i32
    %c0_i32_0 = arith.constant 0 : i32
    %c0_i32_1 = arith.constant 0 : i32
    return %c0_i32, %c0_i32_0 : i32, i32
  }
  func.func @transform_2(%arg0: i32) -> (i32, i32, i32) {
    %c0_i32 = arith.constant 0 : i32
    %c0_i32_0 = arith.constant 0 : i32
    %c0_i32_1 = arith.constant 0 : i32
    return %arg0, %c0_i32, %c0_i32_0 : i32, i32, i32
  }
  func.func @transform_3(%arg0: i32) -> (i32, i32, i32) {
    %c0_i32 = arith.constant 0 : i32
    %c0_i32_0 = arith.constant 0 : i32
    %c0_i32_1 = arith.constant 0 : i32
    return %arg0, %c0_i32, %c0_i32_0 : i32, i32, i32
  }
}

</mosaic_0001>

<llo_original>
// kernel: tpu_custom_call.1
$region0: #{tpu_custom_call.1}
  #allocation0 [shape = 'u32[]', space=smem, size = 0x4, offset = 0x4, fixed_abs, tag = 'smem constant byte address 0x4 - core index']
  #allocation1 [shape = 'u32[144,128]{1,0:T(1,128)}', space=vmem, size = 0x12000, scoped, tag = 'internal scratch']
  #allocation2 [shape = 'f32[128,12]{1,0:T(8,128)}', space=vmem, size = 0x10000, scoped, tag = 'scratch operand']
  #allocation3 [shape = 'f32[16,96]{1,0:T(8,128)}', space=vmem, size = 0x2000, scoped, tag = 'scratch operand']
  %s0 = inlined_call_operand.vmem [shape: f32[8,16], index: 0, kind: input, shape index: {}]
  %s1 = inlined_call_operand.vmem [shape: f32[16,12], index: 1, kind: input, shape index: {}]
  %s2 = inlined_call_operand.vmem [shape: f32[1,128,16], index: 2, kind: input, shape index: {}]
  %s3 = inlined_call_operand.hbm [shape: f32[1,8,96], index: 3, kind: output, shape index: {}]
  %s4 = sld [smem:[#allocation0]]
  $region22: #{tpu_custom_call.1} parent=0
    _
  %s6 = ssub.s32 1, %s4
  %s7 = scalar_select 0, %s6, %s4
  $region1: #{tpu_custom_call.1} parent=0
    #allocation4 [shape = 'u8[4096]{0}', space=vmem, size = 0x1000, scoped, tag = 'output window, operand 0, single buffered']
    #allocation5 [shape = 's32[1]{0}', space=sflag, size = 0x4, scoped, tag = 'scoped memory for tpu_custom_call.1']
    %8 = vsyncpa [#allocation5], 0
    // Predicated region
    $region2: #{tpu_custom_call.1} parent=1 // pred_check
      _
    $region3: #{tpu_custom_call.1} parent=1 // pred_check_branch
      %10 = sbr.rel (0) target = $region5
    $region4: #{tpu_custom_call.1} parent=1 // pred_region
      _
    $region5: #{tpu_custom_call.1} parent=1 // pred_fallthru
      _
    // Predicated region
    $region6: #{tpu_custom_call.1} parent=1 // pred_check
      _
    $region7: #{tpu_custom_call.1} parent=1 // pred_check_branch
      %12 = sbr.rel (0) target = $region9
    $region8: #{tpu_custom_call.1} parent=1 // pred_region
      _
    $region9: #{tpu_custom_call.1} parent=1 // pred_fallthru
      _
    // Predicated region
    $region10: #{tpu_custom_call.1} parent=1 // pred_check
      _
    $region11: #{tpu_custom_call.1} parent=1 // pred_check_branch
      %14 = sbr.rel (0) target = $region13
    $region12: #{tpu_custom_call.1} parent=1 // pred_region
      _
    $region13: #{tpu_custom_call.1} parent=1 // pred_fallthru
      _
    %v15 = vld [vmem:[%s2] sm:$0xff]
    %v16 = vld [vmem:[%s2 + $0x8] sm:$0xff]
    %v17 = vld [vmem:[%s2 + $0x10] sm:$0xff]
    %v18 = vld [vmem:[%s2 + $0x18] sm:$0xff]
    %v19 = vld [vmem:[%s2 + $0x20] sm:$0xff]
    %v20 = vld [vmem:[%s2 + $0x28] sm:$0xff]
    %v21 = vld [vmem:[%s2 + $0x30] sm:$0xff]
    %v22 = vld [vmem:[%s2 + $0x38] sm:$0xff]
    %v23 = vld [vmem:[%s2 + $0x40] sm:$0xff]
    %v24 = vld [vmem:[%s2 + $0x48] sm:$0xff]
    %v25 = vld [vmem:[%s2 + $0x50] sm:$0xff]
    %v26 = vld [vmem:[%s2 + $0x58] sm:$0xff]
    %v27 = vld [vmem:[%s2 + $0x60] sm:$0xff]
    %v28 = vld [vmem:[%s2 + $0x68] sm:$0xff]
    %v29 = vld [vmem:[%s2 + $0x70] sm:$0xff]
    %v30 = vld [vmem:[%s2 + $0x78] sm:$0xff]
    %v31 = vld [vmem:[%s1] sm:$0xff]
    %v32 = vld [vmem:[%s1 + $0x8] sm:$0xff]
    %vm33 = vcmask 130048
    %v35 = vsel %vm33, %v15, 0
    %v38 = vsel %vm33, %v16, 0
    %v41 = vsel %vm33, %v17, 0
    %v44 = vsel %vm33, %v18, 0
    %v47 = vsel %vm33, %v19, 0
    %v50 = vsel %vm33, %v20, 0
    %v53 = vsel %vm33, %v21, 0
    %v56 = vsel %vm33, %v22, 0
    %v59 = vsel %vm33, %v23, 0
    %v62 = vsel %vm33, %v24, 0
    %v65 = vsel %vm33, %v25, 0
    %v68 = vsel %vm33, %v26, 0
    %v71 = vsel %vm33, %v27, 0
    %v74 = vsel %vm33, %v28, 0
    %v77 = vsel %vm33, %v29, 0
    %v80 = vsel %vm33, %v30, 0
    %82 = vmatprep.subr.mxu0 0.0
    %83 = vmatpush1.msra.mxu0 %v31
    %84 = vmatprep.subr.mxu0 0.0
    %85 = vmatpush1.msra.mxu0 %v32
    %86 = vmatprep.subr.mxu0 0.0
    %87 = vmatpush1.msra.mxu0 0.0
    %88 = vmatprep.subr.mxu0 0.0
    %89 = vmatpush1.msra.mxu0 0.0
    %90 = vmatprep.subr.mxu0 0.0
    %91 = vmatpush1.msra.mxu0 0.0
    %92 = vmatprep.subr.mxu0 0.0
    %93 = vmatpush1.msra.mxu0 0.0
    %94 = vmatprep.subr.mxu0 0.0
    %95 = vmatpush1.msra.mxu0 0.0
    %96 = vmatprep.subr.mxu0 0.0
    %97 = vmatpush1.msra.mxu0 0.0
    %98 = vmatprep.subr.mxu0 0.0
    %99 = vmatpush1.msra.mxu0 0.0
    %100 = vmatprep.subr.mxu0 0.0
    %101 = vmatpush1.msra.mxu0 0.0
    %102 = vmatprep.subr.mxu0 0.0
    %103 = vmatpush1.msra.mxu0 0.0
    %104 = vmatprep.subr.mxu0 0.0
    %105 = vmatpush1.msra.mxu0 0.0
    %106 = vmatprep.subr.mxu0 0.0
    %107 = vmatpush1.msra.mxu0 0.0
    %108 = vmatprep.subr.mxu0 0.0
    %109 = vmatpush1.msra.mxu0 0.0
    %110 = vmatprep.subr.mxu0 0.0
    %111 = vmatpush1.msra.mxu0 0.0
    %112 = vmatprep.subr.mxu0 0.0
    %113 = vmatpush1.msra.mxu0 0.0
    %114 = vmatprep.subr.mxu0 0.0
    %115 = vmatpush1.msra.mxu0 0.0
    %116 = vmatprep.subr.mxu0 0.0
    %117 = vmatpush1.msra.mxu0 0.0
    %118 = vmatprep.subr.mxu0 0.0
    %119 = vmatpush1.msra.mxu0 0.0
    %120 = vmatprep.subr.mxu0 0.0
    %121 = vmatpush1.msra.mxu0 0.0
    %122 = vmatprep.subr.mxu0 0.0
    %123 = vmatpush1.msra.mxu0 0.0
    %124 = vmatprep.subr.mxu0 0.0
    %125 = vmatpush1.msra.mxu0 0.0
    %126 = vmatprep.subr.mxu0 0.0
    %127 = vmatpush1.msra.mxu0 0.0
    %128 = vmatprep.subr.mxu0 0.0
    %129 = vmatpush1.msra.mxu0 0.0
    %130 = vmatprep.subr.mxu0 0.0
    %131 = vmatpush1.msra.mxu0 0.0
    %132 = vmatprep.subr.mxu0 0.0
    %133 = vmatpush1.msra.mxu0 0.0
    %134 = vmatprep.subr.mxu0 0.0
    %135 = vmatpush1.msra.mxu0 0.0
    %136 = vmatprep.subr.mxu0 0.0
    %137 = vmatpush1.msra.mxu0 0.0
    %138 = vmatprep.subr.mxu0 0.0
    %139 = vmatpush1.msra.mxu0 0.0
    %140 = vmatprep.subr.mxu0 0.0
    %141 = vmatpush1.msra.mxu0 0.0
    %142 = vmatprep.subr.mxu0 0.0
    %143 = vmatpush1.msra.mxu0 0.0
    %144 = vmatprep.subr.mxu0 0.0
    %145 = vmatpush1.msra.mxu0 0.0
    %146 = vmatprep.mubr.f32.mxu0 0.0
    %147 = vmatmul.mubr.f32.gmra.mrb[0].mxu0 %v35
    %v148 = vpop.f32.mrb[0].mxu0
    %v149 = vadd.f32 0.0, %v148
    %v150 = vpop.f32.mrb[0].mxu0
    %151 = vmatprep.mubr.f32.mxu0 0.0
    %152 = vmatmul.mubr.f32.gmra.mrb[0].mxu0 %v38
    %v153 = vpop.f32.mrb[0].mxu0
    %v154 = vadd.f32 0.0, %v153
    %v155 = vpop.f32.mrb[0].mxu0
    %156 = vmatprep.mubr.f32.mxu0 0.0
    %157 = vmatmul.mubr.f32.gmra.mrb[0].mxu0 %v41
    %v158 = vpop.f32.mrb[0].mxu0
    %v159 = vadd.f32 0.0, %v158
    %v160 = vpop.f32.mrb[0].mxu0
    %161 = vmatprep.mubr.f32.mxu0 0.0
    %162 = vmatmul.mubr.f32.gmra.mrb[0].mxu0 %v44
    %v163 = vpop.f32.mrb[0].mxu0
    %v164 = vadd.f32 0.0, %v163
    %v165 = vpop.f32.mrb[0].mxu0
    %166 = vmatprep.mubr.f32.mxu0 0.0
    %167 = vmatmul.mubr.f32.gmra.mrb[0].mxu0 %v47
    %v168 = vpop.f32.mrb[0].mxu0
    %v169 = vadd.f32 0.0, %v168
    %v170 = vpop.f32.mrb[0].mxu0
    %171 = vmatprep.mubr.f32.mxu0 0.0
    %172 = vmatmul.mubr.f32.gmra.mrb[0].mxu0 %v50
    %v173 = vpop.f32.mrb[0].mxu0
    %v174 = vadd.f32 0.0, %v173
    %v175 = vpop.f32.mrb[0].mxu0
    %176 = vmatprep.mubr.f32.mxu0 0.0
    %177 = vmatmul.mubr.f32.gmra.mrb[0].mxu0 %v53
    %v178 = vpop.f32.mrb[0].mxu0
    %v179 = vadd.f32 0.0, %v178
    %v180 = vpop.f32.mrb[0].mxu0
    %181 = vmatprep.mubr.f32.mxu0 0.0
    %182 = vmatmul.mubr.f32.gmra.mrb[0].mxu0 %v56
    %v183 = vpop.f32.mrb[0].mxu0
    %v184 = vadd.f32 0.0, %v183
    %v185 = vpop.f32.mrb[0].mxu0
    %186 = vmatprep.mubr.f32.mxu0 0.0
    %187 = vmatmul.mubr.f32.gmra.mrb[0].mxu0 %v59
    %v188 = vpop.f32.mrb[0].mxu0
    %v189 = vadd.f32 0.0, %v188
    %v190 = vpop.f32.mrb[0].mxu0
    %191 = vmatprep.mubr.f32.mxu0 0.0
    %192 = vmatmul.mubr.f32.gmra.mrb[0].mxu0 %v62
    %v193 = vpop.f32.mrb[0].mxu0
    %v194 = vadd.f32 0.0, %v193
    %v195 = vpop.f32.mrb[0].mxu0
    %196 = vmatprep.mubr.f32.mxu0 0.0
    %197 = vmatmul.mubr.f32.gmra.mrb[0].mxu0 %v65
    %v198 = vpop.f32.mrb[0].mxu0
    %v199 = vadd.f32 0.0, %v198
    %v200 = vpop.f32.mrb[0].mxu0
    %201 = vmatprep.mubr.f32.mxu0 0.0
    %202 = vmatmul.mubr.f32.gmra.mrb[0].mxu0 %v68
    %v203 = vpop.f32.mrb[0].mxu0
    %v204 = vadd.f32 0.0, %v203
    %v205 = vpop.f32.mrb[0].mxu0
    %206 = vmatprep.mubr.f32.mxu0 0.0
    %207 = vmatmul.mubr.f32.gmra.mrb[0].mxu0 %v71
    %v208 = vpop.f32.mrb[0].mxu0
    %v209 = vadd.f32 0.0, %v208
    %v210 = vpop.f32.mrb[0].mxu0
    %211 = vmatprep.mubr.f32.mxu0 0.0
    %212 = vmatmul.mubr.f32.gmra.mrb[0].mxu0 %v74
    %v213 = vpop.f32.mrb[0].mxu0
    %v214 = vadd.f32 0.0, %v213
    %v215 = vpop.f32.mrb[0].mxu0
    %216 = vmatprep.mubr.f32.mxu0 0.0
    %217 = vmatmul.mubr.f32.gmra.mrb[0].mxu0 %v77
    %v218 = vpop.f32.mrb[0].mxu0
    %v219 = vadd.f32 0.0, %v218
    %v220 = vpop.f32.mrb[0].mxu0
    %221 = vmatprep.mubr.f32.mxu0 0.0
    %222 = vmatmul.mubr.f32.gmra.mrb[0].mxu0 %v80
    %v223 = vpop.f32.mrb[0].mxu0
    %v224 = vadd.f32 0.0, %v223
    %v225 = vpop.f32.mrb[0].mxu0
    %226 = vdwg.mxu0
    %vm227 = vcmask 97280
    %228 = vst.msk [vmem:[#allocation2] sm:$0xff] %vm227, %v149
    %229 = vst.msk [vmem:[#allocation2 + $0x8] sm:$0xff] %vm227, %v154
    %230 = vst.msk [vmem:[#allocation2 + $0x10] sm:$0xff] %vm227, %v159
    %231 = vst.msk [vmem:[#allocation2 + $0x18] sm:$0xff] %vm227, %v164
    %232 = vst.msk [vmem:[#allocation2 + $0x20] sm:$0xff] %vm227, %v169
    %233 = vst.msk [vmem:[#allocation2 + $0x28] sm:$0xff] %vm227, %v174
    %234 = vst.msk [vmem:[#allocation2 + $0x30] sm:$0xff] %vm227, %v179
    %235 = vst.msk [vmem:[#allocation2 + $0x38] sm:$0xff] %vm227, %v184
    %236 = vst.msk [vmem:[#allocation2 + $0x40] sm:$0xff] %vm227, %v189
    %237 = vst.msk [vmem:[#allocation2 + $0x48] sm:$0xff] %vm227, %v194
    %238 = vst.msk [vmem:[#allocation2 + $0x50] sm:$0xff] %vm227, %v199
    %239 = vst.msk [vmem:[#allocation2 + $0x58] sm:$0xff] %vm227, %v204
    %240 = vst.msk [vmem:[#allocation2 + $0x60] sm:$0xff] %vm227, %v209
    %241 = vst.msk [vmem:[#allocation2 + $0x68] sm:$0xff] %vm227, %v214
    %242 = vst.msk [vmem:[#allocation2 + $0x70] sm:$0xff] %vm227, %v219
    %243 = vst.msk [vmem:[#allocation2 + $0x78] sm:$0xff] %vm227, %v224
    %v244 = vld [vmem:[#allocation2] sm:$0xff]
    %v245 = vld [vmem:[#allocation2 + $0x8] sm:$0xff]
    %246 = vst.msk [vmem:[#allocation3] sm:$0xff] %vm227, %v244
    %247 = vst.msk [vmem:[#allocation3 + $0x8] sm:$0xff] %vm227, %v245
    %v248 = vld [vmem:[#allocation2 + $0x10] sm:$0xff]
    %v249 = vld [vmem:[#allocation2 + $0x18] sm:$0xff]
    %252 = vrot.lane.b32.xlu0 %v248, 12
    %v253 = vpop.permute.xlu0 %252
    %254 = vrot.lane.b32.xlu0 %v249, 12
    %v255 = vpop.permute.xlu0 %254
    %vm258 = vcmask 195680
    %259 = vst.msk [vmem:[#allocation3] sm:$0xff] %vm258, %v253
    %260 = vst.msk [vmem:[#allocation3 + $0x8] sm:$0xff] %vm258, %v255
    %v261 = vld [vmem:[#allocation2 + $0x20] sm:$0xff]
    %v262 = vld [vmem:[#allocation2 + $0x28] sm:$0xff]
    %265 = vrot.lane.b32.xlu0 %v261, 24
    %v266 = vpop.permute.xlu0 %265
    %267 = vrot.lane.b32.xlu0 %v262, 24
    %v268 = vpop.permute.xlu0 %267
    %vm271 = vcmask 294080
    %272 = vst.msk [vmem:[#allocation3] sm:$0xff] %vm271, %v266
    %273 = vst.msk [vmem:[#allocation3 + $0x8] sm:$0xff] %vm271, %v268
    %v274 = vld [vmem:[#allocation2 + $0x30] sm:$0xff]
    %v275 = vld [vmem:[#allocation2 + $0x38] sm:$0xff]
    %278 = vrot.lane.b32.xlu0 %v274, 36
    %v279 = vpop.permute.xlu0 %278
    %280 = vrot.lane.b32.xlu0 %v275, 36
    %v281 = vpop.permute.xlu0 %280
    %vm284 = vcmask 392480
    %285 = vst.msk [vmem:[#allocation3] sm:$0xff] %vm284, %v279
    %286 = vst.msk [vmem:[#allocation3 + $0x8] sm:$0xff] %vm284, %v281
    %v287 = vld [vmem:[#allocation2 + $0x40] sm:$0xff]
    %v288 = vld [vmem:[#allocation2 + $0x48] sm:$0xff]
    %291 = vrot.lane.b32.xlu0 %v287, 48
    %v292 = vpop.permute.xlu0 %291
    %293 = vrot.lane.b32.xlu0 %v288, 48
    %v294 = vpop.permute.xlu0 %293
    %vm297 = vcmask 490880
    %298 = vst.msk [vmem:[#allocation3] sm:$0xff] %vm297, %v292
    %299 = vst.msk [vmem:[#allocation3 + $0x8] sm:$0xff] %vm297, %v294
    %v300 = vld [vmem:[#allocation2 + $0x50] sm:$0xff]
    %v301 = vld [vmem:[#allocation2 + $0x58] sm:$0xff]
    %304 = vrot.lane.b32.xlu0 %v300, 60
    %v305 = vpop.permute.xlu0 %304
    %306 = vrot.lane.b32.xlu0 %v301, 60
    %v307 = vpop.permute.xlu0 %306
    %vm310 = vcmask 589280
    %311 = vst.msk [vmem:[#allocation3] sm:$0xff] %vm310, %v305
    %312 = vst.msk [vmem:[#allocation3 + $0x8] sm:$0xff] %vm310, %v307
    %v313 = vld [vmem:[#allocation2 + $0x60] sm:$0xff]
    %v314 = vld [vmem:[#allocation2 + $0x68] sm:$0xff]
    %317 = vrot.lane.b32.xlu0 %v313, 72
    %v318 = vpop.permute.xlu0 %317
    %319 = vrot.lane.b32.xlu0 %v314, 72
    %v320 = vpop.permute.xlu0 %319
    %vm323 = vcmask 687680
    %324 = vst.msk [vmem:[#allocation3] sm:$0xff] %vm323, %v318
    %325 = vst.msk [vmem:[#allocation3 + $0x8] sm:$0xff] %vm323, %v320
    %v326 = vld [vmem:[#allocation2 + $0x70] sm:$0xff]
    %v327 = vld [vmem:[#allocation2 + $0x78] sm:$0xff]
    %330 = vrot.lane.b32.xlu0 %v326, 84
    %v331 = vpop.permute.xlu0 %330
    %332 = vrot.lane.b32.xlu0 %v327, 84
    %v333 = vpop.permute.xlu0 %332
    %vm336 = vcmask 786080
    %337 = vst.msk [vmem:[#allocation3] sm:$0xff] %vm336, %v331
    %338 = vst.msk [vmem:[#allocation3 + $0x8] sm:$0xff] %vm336, %v333
    %v339 = vld [vmem:[%s0] sm:$0xff]
    %v340 = vld [vmem:[#allocation3] sm:$0xff]
    %v341 = vld [vmem:[#allocation3 + $0x8] sm:$0xff]
    %v343 = vsel %vm33, %v339, 0
    %345 = vmatprep.subr.mxu0 0.0
    %346 = vmatpush1.msra.mxu0 %v340
    %347 = vmatprep.subr.mxu0 0.0
    %348 = vmatpush1.msra.mxu0 %v341
    %349 = vmatprep.subr.mxu0 0.0
    %350 = vmatpush1.msra.mxu0 0.0
    %351 = vmatprep.subr.mxu0 0.0
    %352 = vmatpush1.msra.mxu0 0.0
    %353 = vmatprep.subr.mxu0 0.0
    %354 = vmatpush1.msra.mxu0 0.0
    %355 = vmatprep.subr.mxu0 0.0
    %356 = vmatpush1.msra.mxu0 0.0
    %357 = vmatprep.subr.mxu0 0.0
    %358 = vmatpush1.msra.mxu0 0.0
    %359 = vmatprep.subr.mxu0 0.0
    %360 = vmatpush1.msra.mxu0 0.0
    %361 = vmatprep.subr.mxu0 0.0
    %362 = vmatpush1.msra.mxu0 0.0
    %363 = vmatprep.subr.mxu0 0.0
    %364 = vmatpush1.msra.mxu0 0.0
    %365 = vmatprep.subr.mxu0 0.0
    %366 = vmatpush1.msra.mxu0 0.0
    %367 = vmatprep.subr.mxu0 0.0
    %368 = vmatpush1.msra.mxu0 0.0
    %369 = vmatprep.subr.mxu0 0.0
    %370 = vmatpush1.msra.mxu0 0.0
    %371 = vmatprep.subr.mxu0 0.0
    %372 = vmatpush1.msra.mxu0 0.0
    %373 = vmatprep.subr.mxu0 0.0
    %374 = vmatpush1.msra.mxu0 0.0
    %375 = vmatprep.subr.mxu0 0.0
    %376 = vmatpush1.msra.mxu0 0.0
    %377 = vmatprep.subr.mxu0 0.0
    %378 = vmatpush1.msra.mxu0 0.0
    %379 = vmatprep.subr.mxu0 0.0
    %380 = vmatpush1.msra.mxu0 0.0
    %381 = vmatprep.subr.mxu0 0.0
    %382 = vmatpush1.msra.mxu0 0.0
    %383 = vmatprep.subr.mxu0 0.0
    %384 = vmatpush1.msra.mxu0 0.0
    %385 = vmatprep.subr.mxu0 0.0
    %386 = vmatpush1.msra.mxu0 0.0
    %387 = vmatprep.subr.mxu0 0.0
    %388 = vmatpush1.msra.mxu0 0.0
    %389 = vmatprep.subr.mxu0 0.0
    %390 = vmatpush1.msra.mxu0 0.0
    %391 = vmatprep.subr.mxu0 0.0
    %392 = vmatpush1.msra.mxu0 0.0
    %393 = vmatprep.subr.mxu0 0.0
    %394 = vmatpush1.msra.mxu0 0.0
    %395 = vmatprep.subr.mxu0 0.0
    %396 = vmatpush1.msra.mxu0 0.0
    %397 = vmatprep.subr.mxu0 0.0
    %398 = vmatpush1.msra.mxu0 0.0
    %399 = vmatprep.subr.mxu0 0.0
    %400 = vmatpush1.msra.mxu0 0.0
    %401 = vmatprep.subr.mxu0 0.0
    %402 = vmatpush1.msra.mxu0 0.0
    %403 = vmatprep.subr.mxu0 0.0
    %404 = vmatpush1.msra.mxu0 0.0
    %405 = vmatprep.subr.mxu0 0.0
    %406 = vmatpush1.msra.mxu0 0.0
    %407 = vmatprep.subr.mxu0 0.0
    %408 = vmatpush1.msra.mxu0 0.0
    %409 = vmatprep.mubr.f32.mxu0 0.0
    %410 = vmatmul.mubr.f32.gmra.mrb[0].mxu0 %v343
    %v411 = vpop.f32.mrb[0].mxu0
    %v412 = vadd.f32 0.0, %v411
    %v413 = vpop.f32.mrb[0].mxu0
    %414 = vdwg.mxu0
    %vm415 = vcmask 785408
    %416 = vst.msk [vmem:[#allocation4] sm:$0xff] %vm415, %v412
    // Predicated region
    $region14: #{tpu_custom_call.1} parent=1 // pred_check
      _
    $region15: #{tpu_custom_call.1} parent=1 // pred_check_branch
      %418 = sbr.rel (0) target = $region17
    $region16: #{tpu_custom_call.1} parent=1 // pred_region
      %s420 = ssub.s32 128, 128
      %421 = vsyncadd [#allocation5], %s420
      %s423 = sshll.u32 [#allocation4], 4
      %s424 = int_to_ptr.vmem [resolvable:$true] %s423
      %426 = dma.vmem_to_hbm [thread:$0]  %s424, 128, %s3, [#allocation5]
    $region17: #{tpu_custom_call.1} parent=1 // pred_fallthru
      _
    // Predicated region
    $region18: #{tpu_custom_call.1} parent=1 // pred_check
      _
    $region19: #{tpu_custom_call.1} parent=1 // pred_check_branch
      %428 = sbr.rel (0) target = $region21
    $region20: #{tpu_custom_call.1} parent=1 // pred_region
      %429 = dma.done [#allocation5], 128
    $region21: #{tpu_custom_call.1} parent=1 // pred_fallthru
      _
    %430 = vsyncpa [#allocation5], 1

</llo_original>
